<compile_context>
chip_gen: v5e
topology: v5e:2x2
jax: 0.10.0
libtpu: 0.0.40
codegen_flags: <defaults>
</compile_context>

<pallas_src>
import functools

import jax
import jax.numpy as jnp
from jax.experimental import pallas as pl
from jax.experimental.pallas import tpu as pltpu

MiB = 1024 * 1024


# ----------------------------------------------------------------------------
# Parameter setup (glue, plain JAX) — mirrors BlockGRU.blockify_params.
# ----------------------------------------------------------------------------
def blockify_matrix(mat, k):
    """JAX equivalent of zero_matrix_elements: keep only the block diagonal."""
    r, c = mat.shape
    assert r % k == 0 and c % k == 0
    g1, g2 = r // k, c // k
    row_blk = jnp.arange(r) // g1
    col_blk = jnp.arange(c) // g2
    mask = (row_blk[:, None] == col_blk[None, :]).astype(mat.dtype)
    return mat * mask


def init_block_gru_params(key, ninp, nhid, k, dtype=jnp.float32):
    """Deterministic GRUCell params (PyTorch layout/convention), blockified."""
    bound = 1.0 / jnp.sqrt(jnp.asarray(nhid, dtype))
    k1, k2, k3, k4 = jax.random.split(key, 4)
    w_ih = jax.random.uniform(k1, (3 * nhid, ninp), dtype, -bound, bound)
    w_hh = jax.random.uniform(k2, (3 * nhid, nhid), dtype, -bound, bound)
    b_ih = jax.random.uniform(k3, (3 * nhid,), dtype, -bound, bound)
    b_hh = jax.random.uniform(k4, (3 * nhid,), dtype, -bound, bound)

    def blockify_weight(w):
        slabs = [blockify_matrix(w[e * nhid:(e + 1) * nhid], k) for e in range(3)]
        return jnp.concatenate(slabs, axis=0)

    return blockify_weight(w_ih), blockify_weight(w_hh), b_ih, b_hh


# ----------------------------------------------------------------------------
# Generation-aware sizing helpers.
# ----------------------------------------------------------------------------
def _round_up(x, m):
    return (x + m - 1) // m * m


def _device_kind():
    try:
        return jax.devices()[0].device_kind.lower()
    except Exception:
        return ""


def _vmem_capacity_bytes():
    try:
        cap = int(pltpu.get_tpu_info().vmem_capacity_bytes)
        return min(max(cap, 32 * MiB), 128 * MiB)
    except Exception:
        pass
    kind = _device_kind()
    if "v7" in kind:
        return 64 * MiB
    if "v4" in kind or "v5" in kind or "v6" in kind:
        return 128 * MiB
    return 64 * MiB  # conservative default (fits every generation)


def _vmem_limit_bytes():
    # v7x (64 MiB) -> 48 MiB; v5e/v6e (128 MiB) -> 96 MiB.
    return int(min(max(_vmem_capacity_bytes() * 3 // 4, 32 * MiB), 112 * MiB))


def _weight_tile_budget_bytes():
    # Per-hidden-tile fused weight slab (double-buffered by the pipeline).
    return max(_vmem_capacity_bytes() // 5, 8 * MiB)


def _default_tb_max():
    # 256-wide MXU on v6e/v7x; keep 128 on v5e.
    return 128 if "v5" in _device_kind() else 256


def _pick_tn(nhid_p, k_total, itemsize, budget):
    """Largest multiple of 128 dividing nhid_p whose fused weight slab fits."""
    tn = nhid_p
    while tn > 128:
        if nhid_p % tn == 0 and 3 * k_total * tn * itemsize <= budget:
            return tn
        tn -= 128                       # always steps in lane multiples (fixes 384 stall)
    return 128


# ----------------------------------------------------------------------------
# Canonical kernel-side parameter layout (built ONCE, outside the step loop).
# ----------------------------------------------------------------------------
def _fused_dense_layout(w, nhid, kdim, tn, nhid_p, kdim_p):
    """(3*nhid, kdim) -> (n_tiles*kdim_p, 3*tn): per hidden tile, lanes are [r|z|n]."""
    w3 = jnp.transpose(w.reshape(3, nhid, kdim), (0, 2, 1))          # (3, kdim, nhid)
    w3 = jnp.pad(w3, ((0, 0), (0, kdim_p - kdim), (0, nhid_p - nhid)))
    n_t = nhid_p // tn
    w4 = w3.reshape(3, kdim_p, n_t, tn)
    w4 = jnp.transpose(w4, (2, 1, 0, 3))                              # (n_t, kdim_p, 3, tn)
    return w4.reshape(n_t * kdim_p, 3 * tn)


def _fused_block_layout(w, nhid, kdim, k):
    """Store only the k diagonal blocks: (3*nhid, kdim) -> (k*(kdim//k), 3*(nhid//k))."""
    nb_h, nb_k = nhid // k, kdim // k
    w3 = jnp.transpose(w.reshape(3, nhid, kdim), (0, 2, 1))          # (3, kdim, nhid)
    blocks = w3.reshape(3, k, nb_k, k, nb_h)
    diag = jnp.diagonal(blocks, axis1=1, axis2=3)                    # (3, nb_k, nb_h, k)
    diag = jnp.transpose(diag, (3, 1, 0, 2))                         # (k, nb_k, 3, nb_h)
    return diag.reshape(k * nb_k, 3 * nb_h)


def prepare_block_gru_params(w_ih, w_hh, b_ih, b_hh, k=1,
                             param_dtype=jnp.bfloat16, tn=None):
    """Pre-transpose / pad GRU weights into the kernel layout (do this once).

    Returns a dict with fused per-hidden-tile weight slabs:
      wih : (n_tiles * kin_tile, 3*tn)   lanes = [W_r^T | W_z^T | W_n^T] of the tile
      whh : (n_tiles * khid_tile, 3*tn)
      bias: (4, nhid_p) f32 rows [b_r(ih+hh), b_z(ih+hh), b_ih_n, b_hh_n]
    When k > 1 and nhid//k, ninp//k are multiples of 128, only the diagonal
    blocks are stored (block_diag=True) and each hidden tile is one block.
    """
    three_nhid, ninp = w_ih.shape
    nhid = three_nhid // 3
    assert w_ih.shape == (3 * nhid, ninp)
    assert w_hh.shape == (3 * nhid, nhid)

    itemsize = jnp.dtype(param_dtype if param_dtype is not None else w_ih.dtype).itemsize
    budget = _weight_tile_budget_bytes()

    use_block = (k > 1 and ninp % k == 0 and nhid % k == 0
                 and (ninp // k) % 128 == 0 and (nhid // k) % 128 == 0)
    if use_block:
        nb_h, nb_in = nhid // k, ninp // k
        if 3 * (nb_in + nb_h) * nb_h * itemsize > budget:
            # TODO(synk): sub-tile oversized diagonal blocks instead of densifying.
            use_block = False
        elif tn is not None and tn != nb_h:
            use_block = False

    if use_block:
        nhid_p, ninp_p = nhid, ninp
        tn_eff = nb_h
        wih = _fused_block_layout(w_ih, nhid, ninp, k)
        whh = _fused_block_layout(w_hh, nhid, nhid, k)
        kin_tile, khid_tile = nb_in, nb_h
    else:
        nhid_p, ninp_p = _round_up(nhid, 128), _round_up(ninp, 128)
        tn_eff = tn if tn is not None else _pick_tn(nhid_p, ninp_p + nhid_p, itemsize, budget)
        assert tn_eff % 128 == 0 and nhid_p % tn_eff == 0
        wih = _fused_dense_layout(w_ih, nhid, ninp, tn_eff, nhid_p, ninp_p)
        whh = _fused_dense_layout(w_hh, nhid, nhid, tn_eff, nhid_p, nhid_p)
        kin_tile, khid_tile = ninp_p, nhid_p

    if param_dtype is not None:
        # bf16 weights halve the binding weight HBM traffic; matmuls still
        # accumulate in f32.  TODO(synk): fp8 weight path (per-tile scales folded
        # into the f32 epilogue) on v7x to halve weight bytes again.
        wih = wih.astype(param_dtype)
        whh = whh.astype(param_dtype)

    bi3 = b_ih.reshape(3, nhid).astype(jnp.float32)
    bh3 = b_hh.reshape(3, nhid).astype(jnp.float32)
    bias = jnp.stack([bi3[0] + bh3[0],        # r: fold b_ih_r + b_hh_r
                      bi3[1] + bh3[1],        # z: fold b_ih_z + b_hh_z
                      bi3[2],                 # n: i_n bias
                      bh3[2]], axis=0)        #    h_n bias (stays inside r*(.))
    bias = jnp.pad(bias, ((0, 0), (0, nhid_p - nhid)))

    return {"wih": wih, "whh": whh, "bias": bias,
            "ninp": ninp, "nhid": nhid, "ninp_p": ninp_p, "nhid_p": nhid_p,
            "tn": tn_eff, "kin_tile": kin_tile, "khid_tile": khid_tile,
            "block_diag": use_block, "k": k}


# ----------------------------------------------------------------------------
# Pallas kernel: one (hidden-tile, batch-tile) block of a GRUCell step.
# ----------------------------------------------------------------------------
def _gru_cell_kernel(x_ref, h_ref, wih_ref, whh_ref, b_ref, out_ref, *, tn, block_diag):
    f32 = jnp.float32
    x = x_ref[...]                                    # (TB, Kin)
    h = h_ref[...]                                    # (TB, Khid)

    # Two fused (TB, K) @ (K, 3*tn) matmuls on the MXU with f32 accumulation.
    gi = jnp.dot(x, wih_ref[...], preferred_element_type=f32)    # (TB, 3*tn)
    gh = jnp.dot(h, whh_ref[...], preferred_element_type=f32)

    b = b_ref[...].astype(f32)                        # (4, tn)
    # Gate slices at lane offsets 0 / tn / 2*tn (multiples of 128 -> free).
    r = jax.nn.sigmoid(gi[:, :tn] + gh[:, :tn] + b[0:1])
    z = jax.nn.sigmoid(gi[:, tn:2 * tn] + gh[:, tn:2 * tn] + b[1:2])
    n = jnp.tanh(gi[:, 2 * tn:] + b[2:3] + r * (gh[:, 2 * tn:] + b[3:4]))

    if block_diag:
        h_t = h.astype(f32)                           # contraction block == blend tile
    else:
        hj = pl.program_id(0)
        start = pl.multiple_of(hj * tn, 128)
        h_t = h_ref[:, pl.ds(start, tn)].astype(f32)  # blend tile of the full h block

    out_ref[...] = (n + z * (h_t - n)).astype(out_ref.dtype)


def block_gru_forward(x, h, params, *, tb=None):
    """Forward of BlockGRU: returns (h_next, None), matching the PyTorch module."""
    B, ninp = x.shape
    nhid = params["nhid"]
    assert ninp == params["ninp"]
    assert h.shape == (B, nhid)

    wih, whh, bias = params["wih"], params["whh"], params["bias"]
    ninp_p, nhid_p = params["ninp_p"], params["nhid_p"]
    tn = params["tn"]
    kin, khid = params["kin_tile"], params["khid_tile"]
    block_diag = params["block_diag"]
    compute_dtype = wih.dtype
    w_itemsize = jnp.dtype(compute_dtype).itemsize

    # --- tile sizes ----------------------------------------------------------
    if tb is None:
        tb = min(_default_tb_max(), _round_up(B, 8))
    assert tb % 8 == 0
    b_p = _round_up(B, tb)

    n_t = nhid_p // tn
    n_b = b_p // tb
    grid = (n_t, n_b)                 # hidden tiles OUTERMOST -> weight-stationary

    # --- cast once + pad activations (zero rows/cols are inert) --------------
    x_p = x.astype(compute_dtype) if x.dtype != compute_dtype else x
    h_p = h.astype(compute_dtype) if h.dtype != compute_dtype else h
    if b_p != B or ninp_p != ninp:
        x_p = jnp.pad(x_p, ((0, b_p - B), (0, ninp_p - ninp)))
    if b_p != B or nhid_p != nhid:
        h_p = jnp.pad(h_p, ((0, b_p - B), (0, nhid_p - nhid)))

    if block_diag:
        # Each hidden tile (= diagonal block) contracts only its own x/h block.
        x_spec = pl.BlockSpec((tb, kin), lambda hj, bi: (bi, hj))
        h_spec = pl.BlockSpec((tb, khid), lambda hj, bi: (bi, hj))
    else:
        x_spec = pl.BlockSpec((tb, kin), lambda hj, bi: (bi, 0))
        h_spec = pl.BlockSpec((tb, khid), lambda hj, bi: (bi, 0))

    in_specs = [
        x_spec,
        h_spec,
        pl.BlockSpec((kin, 3 * tn), lambda hj, bi: (hj, 0)),    # fused W_ih^T slab (stationary in bi)
        pl.BlockSpec((khid, 3 * tn), lambda hj, bi: (hj, 0)),   # fused W_hh^T slab
        pl.BlockSpec((4, tn), lambda hj, bi: (0, hj)),          # folded biases
    ]
    out_specs = pl.BlockSpec((tb, tn), lambda hj, bi: (bi, hj))

    act_itemsize = jnp.dtype(compute_dtype).itemsize
    out_itemsize = jnp.dtype(h.dtype).itemsize
    flops = int(2 * b_p * (kin + khid) * 3 * tn * n_t)
    w_bytes = int((kin + khid) * 3 * tn * n_t * w_itemsize)           # weights read once
    if block_diag:
        act_bytes = int(b_p * (ninp_p + nhid_p) * act_itemsize)       # disjoint blocks, read once
    else:
        act_bytes = int(n_t * b_p * (ninp_p + nhid_p) * act_itemsize) # x/h re-read per hidden tile
    cost = pl.CostEstimate(
        flops=flops,
        transcendentals=int(3 * b_p * nhid_p),
        bytes_accessed=w_bytes + act_bytes + int(b_p * nhid_p * out_itemsize),
    )

    # TODO(synk): for sequence workloads, fold the timestep loop into one
    # pallas_call (weights DMA'd once into VMEM scratch, h carried in VMEM,
    # h_next aliased onto h with input_output_aliases).
    kernel = functools.partial(_gru_cell_kernel, tn=tn, block_diag=block_diag)
    out = pl.pallas_call(
        kernel,
        out_shape=jax.ShapeDtypeStruct((b_p, nhid_p), h.dtype),
        grid=grid,
        in_specs=in_specs,
        out_specs=out_specs,
        compiler_params=pltpu.CompilerParams(
            dimension_semantics=("parallel", "parallel"),   # megacore-friendly
            vmem_limit_bytes=_vmem_limit_bytes(),           # generation-aware
        ),
        cost_estimate=cost,
    )(x_p, h_p, wih, whh, bias)

    return out[:B, :nhid], None


# ----------------------------------------------------------------------------
# Pure-JAX reference for sanity checks.
# ----------------------------------------------------------------------------
def gru_cell_ref(x, h, w_ih, w_hh, b_ih, b_hh):
    nhid = h.shape[1]
    gi = x @ w_ih.T + b_ih
    gh = h @ w_hh.T + b_hh
    i_r, i_z, i_n = gi[:, :nhid], gi[:, nhid:2 * nhid], gi[:, 2 * nhid:]
    h_r, h_z, h_n = gh[:, :nhid], gh[:, nhid:2 * nhid], gh[:, 2 * nhid:]
    r = jax.nn.sigmoid(i_r + h_r)
    z = jax.nn.sigmoid(i_z + h_z)
    n = jnp.tanh(i_n + r * h_n)
    return (1.0 - z) * n + z * h


if __name__ == "__main__":
    root = jax.random.PRNGKey(0)
    k_case1, k_case2, k_case3 = jax.random.split(root, 3)

    # Case 1: module-like toy shapes (ninp=nhid=32, k=4, B=4); dense path,
    # single lane-dense (8,128) tile.  f32 weights -> tight tolerance.
    ninp, nhid, kblk, B = 32, 32, 4, 4
    kx, kh, kp = jax.random.split(k_case1, 3)
    x = jax.random.normal(kx, (B, ninp), jnp.float32)
    h = jax.random.normal(kh, (B, nhid), jnp.float32)
    w_ih, w_hh, b_ih, b_hh = init_block_gru_params(kp, ninp, nhid, kblk)
    params = prepare_block_gru_params(w_ih, w_hh, b_ih, b_hh, k=kblk,
                                      param_dtype=jnp.float32)
    hnext, aux = block_gru_forward(x, h, params)
    hnext = jax.block_until_ready(hnext)
    assert aux is None and hnext.shape == (B, nhid)
    ref = gru_cell_ref(x, h, w_ih, w_hh, b_ih, b_hh)
    assert jnp.allclose(hnext, ref, atol=1e-5, rtol=1e-5), "case1 mismatch"

    # Case 2: dense multi-tile grid (2 hidden tiles x 2 batch tiles) with
    # explicit overrides; f32 weights.
    ninp2, nhid2, kblk2, B2 = 64, 256, 4, 12
    kx2, kh2, kp2 = jax.random.split(k_case2, 3)
    x2 = jax.random.normal(kx2, (B2, ninp2), jnp.float32)
    h2 = jax.random.normal(kh2, (B2, nhid2), jnp.float32)
    w_ih2, w_hh2, b_ih2, b_hh2 = init_block_gru_params(kp2, ninp2, nhid2, kblk2)
    params2 = prepare_block_gru_params(w_ih2, w_hh2, b_ih2, b_hh2, k=kblk2,
                                       param_dtype=jnp.float32, tn=128)
    assert not params2["block_diag"]
    hnext2, _ = block_gru_forward(x2, h2, params2, tb=8)
    hnext2 = jax.block_until_ready(hnext2)
    ref2 = gru_cell_ref(x2, h2, w_ih2, w_hh2, b_ih2, b_hh2)
    assert jnp.allclose(hnext2, ref2, atol=1e-4, rtol=1e-4), "case2 mismatch"

    # Case 3: block-diagonal fast path (nhid//k = ninp//k = 128); f32 weights.
    ninp3, nhid3, kblk3, B3 = 512, 512, 4, 8
    kx3, kh3, kp3 = jax.random.split(k_case3, 3)
    x3 = jax.random.normal(kx3, (B3, ninp3), jnp.float32)
    h3 = jax.random.normal(kh3, (B3, nhid3), jnp.float32)
    w_ih3, w_hh3, b_ih3, b_hh3 = init_block_gru_params(kp3, ninp3, nhid3, kblk3)
    params3 = prepare_block_gru_params(w_ih3, w_hh3, b_ih3, b_hh3, k=kblk3,
                                       param_dtype=jnp.float32)
    assert params3["block_diag"], "expected block-diagonal fast path"
    hnext3, _ = block_gru_forward(x3, h3, params3)
    hnext3 = jax.block_until_ready(hnext3)
    ref3 = gru_cell_ref(x3, h3, w_ih3, w_hh3, b_ih3, b_hh3)
    assert jnp.allclose(hnext3, ref3, atol=1e-4, rtol=1e-4), "case3 mismatch"

    # Case 4: default bf16 weight/activation path (block-diagonal), loose tol.
    params4 = prepare_block_gru_params(w_ih3, w_hh3, b_ih3, b_hh3, k=kblk3)
    assert params4["wih"].dtype == jnp.bfloat16
    hnext4, _ = block_gru_forward(x3, h3, params4)
    hnext4 = jax.block_until_ready(hnext4)
    assert jnp.allclose(hnext4, ref3, atol=5e-2, rtol=5e-2), "case4 (bf16) mismatch"

    print("KERNEL_OK")
</pallas_src>

<mosaic_0001>
module attributes {stable_mosaic.version = 11 : i64} {
  func.func @_gru_cell_kernel(%arg0: i32, %arg1: i32, %arg2: memref<8x128xf32, #tpu.memory_space<vmem>>, %arg3: memref<8x128xf32, #tpu.memory_space<vmem>>, %arg4: memref<128x384xf32, #tpu.memory_space<vmem>>, %arg5: memref<128x384xf32, #tpu.memory_space<vmem>>, %arg6: memref<4x128xf32, #tpu.memory_space<vmem>>, %arg7: memref<8x128xf32, #tpu.memory_space<vmem>>) attributes {dimension_semantics = [#tpu.dimension_semantics<parallel>, #tpu.dimension_semantics<parallel>], iteration_bounds = array<i64: 1, 1>, scalar_prefetch = 0 : i64, scratch_operands = 0 : i64, tpu.core_type = #tpu.core_type<tc>, window_params = [{transform_indices = @transform_0, window_bounds = array<i64: 8, 128>}, {transform_indices = @transform_1, window_bounds = array<i64: 8, 128>}, {transform_indices = @transform_2, window_bounds = array<i64: 128, 384>}, {transform_indices = @transform_3, window_bounds = array<i64: 128, 384>}, {transform_indices = @transform_4, window_bounds = array<i64: 4, 128>}, {transform_indices = @transform_5, window_bounds = array<i64: 8, 128>}]} {
    %c0 = arith.constant 0 : index
    %c0_0 = arith.constant 0 : index
    %0 = vector.load %arg2[%c0, %c0_0] : memref<8x128xf32, #tpu.memory_space<vmem>>, vector<8x128xf32>
    %c0_1 = arith.constant 0 : index
    %c0_2 = arith.constant 0 : index
    %1 = vector.load %arg3[%c0_1, %c0_2] : memref<8x128xf32, #tpu.memory_space<vmem>>, vector<8x128xf32>
    %c0_3 = arith.constant 0 : index
    %c0_4 = arith.constant 0 : index
    %2 = vector.load %arg4[%c0_3, %c0_4] : memref<128x384xf32, #tpu.memory_space<vmem>>, vector<128x384xf32>
    %cst = arith.constant dense<0.000000e+00> : vector<8x384xf32>
    %3 = tpu.matmul %0, %2, %cst {dimension_numbers = #tpu.dot_dimension_numbers<[1], [0], [0], [1], [0, 0, 1, 1], [], []>} : vector<8x128xf32>, vector<128x384xf32>, vector<8x384xf32> -> vector<8x384xf32>
    %c0_5 = arith.constant 0 : index
    %c0_6 = arith.constant 0 : index
    %4 = vector.load %arg5[%c0_5, %c0_6] : memref<128x384xf32, #tpu.memory_space<vmem>>, vector<128x384xf32>
    %cst_7 = arith.constant dense<0.000000e+00> : vector<8x384xf32>
    %5 = tpu.matmul %1, %4, %cst_7 {dimension_numbers = #tpu.dot_dimension_numbers<[1], [0], [0], [1], [0, 0, 1, 1], [], []>} : vector<8x128xf32>, vector<128x384xf32>, vector<8x384xf32> -> vector<8x384xf32>
    %c0_8 = arith.constant 0 : index
    %c0_9 = arith.constant 0 : index
    %6 = vector.load %arg6[%c0_8, %c0_9] : memref<4x128xf32, #tpu.memory_space<vmem>>, vector<4x128xf32>
    %7 = vector.extract_strided_slice %3 {offsets = [0, 0], sizes = [8, 128], strides = [1, 1]} : vector<8x384xf32> to vector<8x128xf32>
    %8 = vector.extract_strided_slice %5 {offsets = [0, 0], sizes = [8, 128], strides = [1, 1]} : vector<8x384xf32> to vector<8x128xf32>
    %9 = arith.addf %7, %8 : vector<8x128xf32>
    %10 = vector.extract_strided_slice %6 {offsets = [0, 0], sizes = [1, 128], strides = [1, 1]} : vector<4x128xf32> to vector<1x128xf32>
    %11 = vector.broadcast %10 : vector<1x128xf32> to vector<8x128xf32>
    %12 = arith.addf %9, %11 : vector<8x128xf32>
    %13 = arith.negf %12 : vector<8x128xf32>
    %14 = math.exp %13 : vector<8x128xf32>
    %cst_10 = arith.constant 1.000000e+00 : f32
    %15 = vector.broadcast %cst_10 : f32 to vector<8x128xf32>
    %16 = arith.addf %15, %14 : vector<8x128xf32>
    %17 = arith.divf %15, %16 : vector<8x128xf32>
    %18 = vector.extract_strided_slice %3 {offsets = [0, 128], sizes = [8, 128], strides = [1, 1]} : vector<8x384xf32> to vector<8x128xf32>
    %19 = vector.extract_strided_slice %5 {offsets = [0, 128], sizes = [8, 128], strides = [1, 1]} : vector<8x384xf32> to vector<8x128xf32>
    %20 = arith.addf %18, %19 : vector<8x128xf32>
    %21 = vector.extract_strided_slice %6 {offsets = [1, 0], sizes = [1, 128], strides = [1, 1]} : vector<4x128xf32> to vector<1x128xf32>
    %22 = vector.broadcast %21 : vector<1x128xf32> to vector<8x128xf32>
    %23 = arith.addf %20, %22 : vector<8x128xf32>
    %24 = arith.negf %23 : vector<8x128xf32>
    %25 = math.exp %24 : vector<8x128xf32>
    %cst_11 = arith.constant 1.000000e+00 : f32
    %26 = vector.broadcast %cst_11 : f32 to vector<8x128xf32>
    %27 = arith.addf %26, %25 : vector<8x128xf32>
    %28 = arith.divf %26, %27 : vector<8x128xf32>
    %29 = vector.extract_strided_slice %3 {offsets = [0, 256], sizes = [8, 128], strides = [1, 1]} : vector<8x384xf32> to vector<8x128xf32>
    %30 = vector.extract_strided_slice %6 {offsets = [2, 0], sizes = [1, 128], strides = [1, 1]} : vector<4x128xf32> to vector<1x128xf32>
    %31 = vector.broadcast %30 : vector<1x128xf32> to vector<8x128xf32>
    %32 = arith.addf %29, %31 : vector<8x128xf32>
    %33 = vector.extract_strided_slice %5 {offsets = [0, 256], sizes = [8, 128], strides = [1, 1]} : vector<8x384xf32> to vector<8x128xf32>
    %34 = vector.extract_strided_slice %6 {offsets = [3, 0], sizes = [1, 128], strides = [1, 1]} : vector<4x128xf32> to vector<1x128xf32>
    %35 = vector.broadcast %34 : vector<1x128xf32> to vector<8x128xf32>
    %36 = arith.addf %33, %35 : vector<8x128xf32>
    %37 = arith.mulf %17, %36 : vector<8x128xf32>
    %38 = arith.addf %32, %37 : vector<8x128xf32>
    %39 = math.tanh %38 : vector<8x128xf32>
    %c128_i32 = arith.constant 128 : i32
    %40 = arith.muli %arg0, %c128_i32 : i32
    %41 = tpu.assume_multiple %40, 128 : i32
    %c0_12 = arith.constant 0 : index
    %42 = arith.index_cast %41 : i32 to index
    %43 = vector.load %arg3[%c0_12, %42] : memref<8x128xf32, #tpu.memory_space<vmem>>, vector<8x128xf32>
    %44 = arith.subf %43, %39 : vector<8x128xf32>
    %45 = arith.mulf %28, %44 : vector<8x128xf32>
    %46 = arith.addf %39, %45 : vector<8x128xf32>
    %c0_13 = arith.constant 0 : index
    %c0_14 = arith.constant 0 : index
    %47 = vector.load %arg7[%c0_13, %c0_14] : memref<8x128xf32, #tpu.memory_space<vmem>>, vector<8x128xf32>
    tpu.vector_store %arg7[%c0_13, %c0_14], %46 {strides = array<i32>} : memref<8x128xf32, #tpu.memory_space<vmem>>, vector<8x128xf32>,
    return
  }
  func.func @transform_0(%arg0: i32, %arg1: i32) -> (i32, i32) {
    %c0_i32 = arith.constant 0 : i32
    %c0_i32_0 = arith.constant 0 : i32
    return %arg1, %c0_i32 : i32, i32
  }
  func.func @transform_1(%arg0: i32, %arg1: i32) -> (i32, i32) {
    %c0_i32 = arith.constant 0 : i32
    %c0_i32_0 = arith.constant 0 : i32
    return %arg1, %c0_i32 : i32, i32
  }
  func.func @transform_2(%arg0: i32, %arg1: i32) -> (i32, i32) {
    %c0_i32 = arith.constant 0 : i32
    %c0_i32_0 = arith.constant 0 : i32
    return %arg0, %c0_i32 : i32, i32
  }
  func.func @transform_3(%arg0: i32, %arg1: i32) -> (i32, i32) {
    %c0_i32 = arith.constant 0 : i32
    %c0_i32_0 = arith.constant 0 : i32
    return %arg0, %c0_i32 : i32, i32
  }
  func.func @transform_4(%arg0: i32, %arg1: i32) -> (i32, i32) {
    %c0_i32 = arith.constant 0 : i32
    %c0_i32_0 = arith.constant 0 : i32
    return %c0_i32, %arg0 : i32, i32
  }
  func.func @transform_5(%arg0: i32, %arg1: i32) -> (i32, i32) {
    %c0_i32 = arith.constant 0 : i32
    return %arg1, %arg0 : i32, i32
  }
}

</mosaic_0001>

<llo_original>
// kernel: tpu_custom_call.1
$region0: #{tpu_custom_call.1}
  #allocation0 [shape = 'u32[]', space=smem, size = 0x4, offset = 0x4, fixed_abs, tag = 'smem constant byte address 0x4 - core index']
  #allocation1 [shape = 'u32[72,128]{1,0:T(1,128)}', space=vmem, size = 0x9000, scoped, tag = 'internal scratch']
  %s0 = inlined_call_operand.hbm [shape: f32[8,128], index: 0, kind: input, shape index: {}]
  %s1 = inlined_call_operand.hbm [shape: f32[8,128], index: 1, kind: input, shape index: {}]
  %s2 = inlined_call_operand.hbm [shape: f32[128,384], index: 2, kind: input, shape index: {}]
  %s3 = inlined_call_operand.hbm [shape: f32[128,384], index: 3, kind: input, shape index: {}]
  %s4 = inlined_call_operand.hbm [shape: f32[4,128], index: 4, kind: input, shape index: {}]
  %s5 = inlined_call_operand.hbm [shape: f32[8,128], index: 5, kind: output, shape index: {}]
  %s6 = sld [smem:[#allocation0]]
  $region50: #{tpu_custom_call.1} parent=0
    _
  %s8 = ssub.s32 1, %s6
  %s9 = scalar_select 0, %s8, %s6
  $region1: #{tpu_custom_call.1} parent=0
    #allocation2 [shape = 'u8[4096]{0}', space=vmem, size = 0x1000, scoped, tag = 'input window, operand 0, single buffered']
    #allocation3 [shape = 's32[1]{0}', space=sflag, size = 0x4, scoped, tag = 'scoped memory for tpu_custom_call.1']
    #allocation4 [shape = 's32[1]{0}', space=sflag, size = 0x4, scoped, tag = 'scoped memory for tpu_custom_call.1']
    #allocation5 [shape = 'u8[4096]{0}', space=vmem, size = 0x1000, scoped, tag = 'input window, operand 1, single buffered']
    #allocation6 [shape = 's32[1]{0}', space=sflag, size = 0x4, scoped, tag = 'scoped memory for tpu_custom_call.1']
    #allocation7 [shape = 'u8[196608]{0}', space=vmem, size = 0x30000, scoped, tag = 'input window, operand 2, single buffered']
    #allocation8 [shape = 'u8[196608]{0}', space=vmem, size = 0x30000, scoped, tag = 'input window, operand 3, single buffered']
    #allocation9 [shape = 's32[1]{0}', space=sflag, size = 0x4, scoped, tag = 'scoped memory for tpu_custom_call.1']
    #allocation10 [shape = 'u8[2048]{0}', space=vmem, size = 0x800, scoped, tag = 'input window, operand 4, single buffered']
    #allocation11 [shape = 'u8[4096]{0}', space=vmem, size = 0x1000, scoped, tag = 'output window, operand 0, single buffered']
    %10 = vsyncpa [#allocation3], 0
    %11 = vsyncpa [#allocation6], 0
    %12 = vsyncpa [#allocation9], 0
    %13 = vsyncpa [#allocation4], 0
    // Predicated region
    $region2: #{tpu_custom_call.1} parent=1 // pred_check
      _
    $region3: #{tpu_custom_call.1} parent=1 // pred_check_branch
      %15 = sbr.rel (0) target = $region5
    $region4: #{tpu_custom_call.1} parent=1 // pred_region
      %17 = vsyncadd [#allocation3], 0
      %s19 = sshll.u32 %s0, 4
      %s20 = int_to_ptr.hbm [resolvable:$true] %s19
      %s21 = sshll.u32 [#allocation2], 4
      %s22 = int_to_ptr.vmem [resolvable:$true] %s21
      %24 = dma.hbm_to_vmem [thread:$0]  %s20, 128, %s22, [#allocation3]
    $region5: #{tpu_custom_call.1} parent=1 // pred_fallthru
      _
    // Predicated region
    $region6: #{tpu_custom_call.1} parent=1 // pred_check
      _
    $region7: #{tpu_custom_call.1} parent=1 // pred_check_branch
      %26 = sbr.rel (0) target = $region9
    $region8: #{tpu_custom_call.1} parent=1 // pred_region
      %28 = vsyncadd [#allocation6], 0
      %s30 = sshll.u32 %s1, 4
      %s31 = int_to_ptr.hbm [resolvable:$true] %s30
      %s32 = sshll.u32 [#allocation5], 4
      %s33 = int_to_ptr.vmem [resolvable:$true] %s32
      %35 = dma.hbm_to_vmem [thread:$0]  %s31, 128, %s33, [#allocation6]
    $region9: #{tpu_custom_call.1} parent=1 // pred_fallthru
      _
    // Predicated region
    $region10: #{tpu_custom_call.1} parent=1 // pred_check
      _
    $region11: #{tpu_custom_call.1} parent=1 // pred_check_branch
      %37 = sbr.rel (0) target = $region13
    $region12: #{tpu_custom_call.1} parent=1 // pred_region
      %39 = vsyncadd [#allocation6], 0
      %s40 = sshll.u32 %s2, 4
      %s41 = int_to_ptr.hbm [resolvable:$true] %s40
      %s42 = sshll.u32 [#allocation7], 4
      %s43 = int_to_ptr.vmem [resolvable:$true] %s42
      %48 = dma.hbm_to_vmem [thread:$0]  %s41, 6144, %s43, [#allocation6], 384, 384, 24
    $region13: #{tpu_custom_call.1} parent=1 // pred_fallthru
      _
    // Predicated region
    $region14: #{tpu_custom_call.1} parent=1 // pred_check
      _
    $region15: #{tpu_custom_call.1} parent=1 // pred_check_branch
      %50 = sbr.rel (0) target = $region17
    $region16: #{tpu_custom_call.1} parent=1 // pred_region
      %52 = vsyncadd [#allocation9], 0
      %s53 = sshll.u32 %s3, 4
      %s54 = int_to_ptr.hbm [resolvable:$true] %s53
      %s55 = sshll.u32 [#allocation8], 4
      %s56 = int_to_ptr.vmem [resolvable:$true] %s55
      %61 = dma.hbm_to_vmem [thread:$0]  %s54, 6144, %s56, [#allocation9], 384, 384, 24
    $region17: #{tpu_custom_call.1} parent=1 // pred_fallthru
      _
    // Predicated region
    $region18: #{tpu_custom_call.1} parent=1 // pred_check
      _
    $region19: #{tpu_custom_call.1} parent=1 // pred_check_branch
      %63 = sbr.rel (0) target = $region21
    $region20: #{tpu_custom_call.1} parent=1 // pred_region
      %65 = vsyncadd [#allocation9], 0
      %s67 = sshll.u32 %s4, 4
      %s68 = int_to_ptr.hbm [resolvable:$true] %s67
      %s69 = sshll.u32 [#allocation10], 4
      %s70 = int_to_ptr.vmem [resolvable:$true] %s69
      %72 = dma.hbm_to_vmem [thread:$0]  %s68, 64, %s70, [#allocation9]
    $region21: #{tpu_custom_call.1} parent=1 // pred_fallthru
      _
    // Predicated region
    $region22: #{tpu_custom_call.1} parent=1 // pred_check
      _
    $region23: #{tpu_custom_call.1} parent=1 // pred_check_branch
      %74 = sbr.rel (0) target = $region25
    $region24: #{tpu_custom_call.1} parent=1 // pred_region
      %76 = dma.done [#allocation3], 128
    $region25: #{tpu_custom_call.1} parent=1 // pred_fallthru
      _
    // Predicated region
    $region26: #{tpu_custom_call.1} parent=1 // pred_check
      _
    $region27: #{tpu_custom_call.1} parent=1 // pred_check_branch
      %78 = sbr.rel (0) target = $region29
    $region28: #{tpu_custom_call.1} parent=1 // pred_region
      %80 = dma.done [#allocation6], 128
    $region29: #{tpu_custom_call.1} parent=1 // pred_fallthru
      _
    // Predicated region
    $region30: #{tpu_custom_call.1} parent=1 // pred_check
      _
    $region31: #{tpu_custom_call.1} parent=1 // pred_check_branch
      %82 = sbr.rel (0) target = $region33
    $region32: #{tpu_custom_call.1} parent=1 // pred_region
      %84 = dma.done [#allocation6], 6144
    $region33: #{tpu_custom_call.1} parent=1 // pred_fallthru
      _
    // Predicated region
    $region34: #{tpu_custom_call.1} parent=1 // pred_check
      _
    $region35: #{tpu_custom_call.1} parent=1 // pred_check_branch
      %86 = sbr.rel (0) target = $region37
    $region36: #{tpu_custom_call.1} parent=1 // pred_region
      %88 = dma.done [#allocation9], 6144
    $region37: #{tpu_custom_call.1} parent=1 // pred_fallthru
      _
    // Predicated region
    $region38: #{tpu_custom_call.1} parent=1 // pred_check
      _
    $region39: #{tpu_custom_call.1} parent=1 // pred_check_branch
      %90 = sbr.rel (0) target = $region41
    $region40: #{tpu_custom_call.1} parent=1 // pred_region
      %92 = dma.done [#allocation9], 64
    $region41: #{tpu_custom_call.1} parent=1 // pred_fallthru
      _
    %v93 = vld [vmem:[#allocation2] sm:$0xff]
    %v94 = vld [vmem:[#allocation5] sm:$0xff]
    %v95 = vld [vmem:[#allocation7] sm:$0xff]
    %v96 = vld [vmem:[#allocation7 + $0x8] sm:$0xff]
    %v97 = vld [vmem:[#allocation7 + $0x10] sm:$0xff]
    %v98 = vld [vmem:[#allocation7 + $0x18] sm:$0xff]
    %v99 = vld [vmem:[#allocation7 + $0x20] sm:$0xff]
    %v100 = vld [vmem:[#allocation7 + $0x28] sm:$0xff]
    %v101 = vld [vmem:[#allocation7 + $0x30] sm:$0xff]
    %v102 = vld [vmem:[#allocation7 + $0x38] sm:$0xff]
    %v103 = vld [vmem:[#allocation7 + $0x40] sm:$0xff]
    %v104 = vld [vmem:[#allocation7 + $0x48] sm:$0xff]
    %v105 = vld [vmem:[#allocation7 + $0x50] sm:$0xff]
    %v106 = vld [vmem:[#allocation7 + $0x58] sm:$0xff]
    %v107 = vld [vmem:[#allocation7 + $0x60] sm:$0xff]
    %v108 = vld [vmem:[#allocation7 + $0x68] sm:$0xff]
    %v109 = vld [vmem:[#allocation7 + $0x70] sm:$0xff]
    %v110 = vld [vmem:[#allocation7 + $0x78] sm:$0xff]
    %v111 = vld [vmem:[#allocation7 + $0x80] sm:$0xff]
    %v112 = vld [vmem:[#allocation7 + $0x88] sm:$0xff]
    %v113 = vld [vmem:[#allocation7 + $0x90] sm:$0xff]
    %v114 = vld [vmem:[#allocation7 + $0x98] sm:$0xff]
    %v115 = vld [vmem:[#allocation7 + $0xa0] sm:$0xff]
    %v116 = vld [vmem:[#allocation7 + $0xa8] sm:$0xff]
    %v117 = vld [vmem:[#allocation7 + $0xb0] sm:$0xff]
    %v118 = vld [vmem:[#allocation7 + $0xb8] sm:$0xff]
    %v119 = vld [vmem:[#allocation7 + $0xc0] sm:$0xff]
    %v120 = vld [vmem:[#allocation7 + $0xc8] sm:$0xff]
    %v121 = vld [vmem:[#allocation7 + $0xd0] sm:$0xff]
    %v122 = vld [vmem:[#allocation7 + $0xd8] sm:$0xff]
    %v123 = vld [vmem:[#allocation7 + $0xe0] sm:$0xff]
    %v124 = vld [vmem:[#allocation7 + $0xe8] sm:$0xff]
    %v125 = vld [vmem:[#allocation7 + $0xf0] sm:$0xff]
    %v126 = vld [vmem:[#allocation7 + $0xf8] sm:$0xff]
    %v127 = vld [vmem:[#allocation7 + $0x100] sm:$0xff]
    %v128 = vld [vmem:[#allocation7 + $0x108] sm:$0xff]
    %v129 = vld [vmem:[#allocation7 + $0x110] sm:$0xff]
    %v130 = vld [vmem:[#allocation7 + $0x118] sm:$0xff]
    %v131 = vld [vmem:[#allocation7 + $0x120] sm:$0xff]
    %v132 = vld [vmem:[#allocation7 + $0x128] sm:$0xff]
    %v133 = vld [vmem:[#allocation7 + $0x130] sm:$0xff]
    %v134 = vld [vmem:[#allocation7 + $0x138] sm:$0xff]
    %v135 = vld [vmem:[#allocation7 + $0x140] sm:$0xff]
    %v136 = vld [vmem:[#allocation7 + $0x148] sm:$0xff]
    %v137 = vld [vmem:[#allocation7 + $0x150] sm:$0xff]
    %v138 = vld [vmem:[#allocation7 + $0x158] sm:$0xff]
    %v139 = vld [vmem:[#allocation7 + $0x160] sm:$0xff]
    %v140 = vld [vmem:[#allocation7 + $0x168] sm:$0xff]
    %v141 = vld [vmem:[#allocation7 + $0x170] sm:$0xff]
    %v142 = vld [vmem:[#allocation7 + $0x178] sm:$0xff]
    %143 = vmatpush.msra.mxu0 %v140
    %144 = vmatpush.msra.mxu0 %v137
    %145 = vmatpush.msra.mxu0 %v134
    %146 = vmatpush.msra.mxu0 %v131
    %147 = vmatpush.msra.mxu0 %v128
    %148 = vmatpush.msra.mxu0 %v125
    %149 = vmatpush.msra.mxu0 %v122
    %150 = vmatpush.msra.mxu0 %v119
    %151 = vmatpush.msra.mxu0 %v116
    %152 = vmatpush.msra.mxu0 %v113
    %153 = vmatpush.msra.mxu0 %v110
    %154 = vmatpush.msra.mxu0 %v107
    %155 = vmatpush.msra.mxu0 %v104
    %156 = vmatpush.msra.mxu0 %v101
    %157 = vmatpush.msra.mxu0 %v98
    %158 = vmatpush.msra.mxu0 %v95
    %159 = vmatmul.f32.gmra.mxu0 %v93
    %v160 = vpop.f32.mrf.mxu0
    %v161 = vadd.f32 0.0, %v160
    %162 = vdwg.mxu0
    %163 = vmatpush.msra.mxu0 %v141
    %164 = vmatpush.msra.mxu0 %v138
    %165 = vmatpush.msra.mxu0 %v135
    %166 = vmatpush.msra.mxu0 %v132
    %167 = vmatpush.msra.mxu0 %v129
    %168 = vmatpush.msra.mxu0 %v126
    %169 = vmatpush.msra.mxu0 %v123
    %170 = vmatpush.msra.mxu0 %v120
    %171 = vmatpush.msra.mxu0 %v117
    %172 = vmatpush.msra.mxu0 %v114
    %173 = vmatpush.msra.mxu0 %v111
    %174 = vmatpush.msra.mxu0 %v108
    %175 = vmatpush.msra.mxu0 %v105
    %176 = vmatpush.msra.mxu0 %v102
    %177 = vmatpush.msra.mxu0 %v99
    %178 = vmatpush.msra.mxu0 %v96
    %179 = vmatmul.f32.gmra.mxu0 %v93
    %v180 = vpop.f32.mrf.mxu0
    %v181 = vadd.f32 0.0, %v180
    %182 = vdwg.mxu0
    %183 = vmatpush.msra.mxu0 %v142
    %184 = vmatpush.msra.mxu0 %v139
    %185 = vmatpush.msra.mxu0 %v136
    %186 = vmatpush.msra.mxu0 %v133
    %187 = vmatpush.msra.mxu0 %v130
    %188 = vmatpush.msra.mxu0 %v127
    %189 = vmatpush.msra.mxu0 %v124
    %190 = vmatpush.msra.mxu0 %v121
    %191 = vmatpush.msra.mxu0 %v118
    %192 = vmatpush.msra.mxu0 %v115
    %193 = vmatpush.msra.mxu0 %v112
    %194 = vmatpush.msra.mxu0 %v109
    %195 = vmatpush.msra.mxu0 %v106
    %196 = vmatpush.msra.mxu0 %v103
    %197 = vmatpush.msra.mxu0 %v100
    %198 = vmatpush.msra.mxu0 %v97
    %199 = vmatmul.f32.gmra.mxu0 %v93
    %v200 = vpop.f32.mrf.mxu0
    %v201 = vadd.f32 0.0, %v200
    %202 = vdwg.mxu0
    %v203 = vld [vmem:[#allocation8] sm:$0xff]
    %v204 = vld [vmem:[#allocation8 + $0x8] sm:$0xff]
    %v205 = vld [vmem:[#allocation8 + $0x10] sm:$0xff]
    %v206 = vld [vmem:[#allocation8 + $0x18] sm:$0xff]
    %v207 = vld [vmem:[#allocation8 + $0x20] sm:$0xff]
    %v208 = vld [vmem:[#allocation8 + $0x28] sm:$0xff]
    %v209 = vld [vmem:[#allocation8 + $0x30] sm:$0xff]
    %v210 = vld [vmem:[#allocation8 + $0x38] sm:$0xff]
    %v211 = vld [vmem:[#allocation8 + $0x40] sm:$0xff]
    %v212 = vld [vmem:[#allocation8 + $0x48] sm:$0xff]
    %v213 = vld [vmem:[#allocation8 + $0x50] sm:$0xff]
    %v214 = vld [vmem:[#allocation8 + $0x58] sm:$0xff]
    %v215 = vld [vmem:[#allocation8 + $0x60] sm:$0xff]
    %v216 = vld [vmem:[#allocation8 + $0x68] sm:$0xff]
    %v217 = vld [vmem:[#allocation8 + $0x70] sm:$0xff]
    %v218 = vld [vmem:[#allocation8 + $0x78] sm:$0xff]
    %v219 = vld [vmem:[#allocation8 + $0x80] sm:$0xff]
    %v220 = vld [vmem:[#allocation8 + $0x88] sm:$0xff]
    %v221 = vld [vmem:[#allocation8 + $0x90] sm:$0xff]
    %v222 = vld [vmem:[#allocation8 + $0x98] sm:$0xff]
    %v223 = vld [vmem:[#allocation8 + $0xa0] sm:$0xff]
    %v224 = vld [vmem:[#allocation8 + $0xa8] sm:$0xff]
    %v225 = vld [vmem:[#allocation8 + $0xb0] sm:$0xff]
    %v226 = vld [vmem:[#allocation8 + $0xb8] sm:$0xff]
    %v227 = vld [vmem:[#allocation8 + $0xc0] sm:$0xff]
    %v228 = vld [vmem:[#allocation8 + $0xc8] sm:$0xff]
    %v229 = vld [vmem:[#allocation8 + $0xd0] sm:$0xff]
    %v230 = vld [vmem:[#allocation8 + $0xd8] sm:$0xff]
    %v231 = vld [vmem:[#allocation8 + $0xe0] sm:$0xff]
    %v232 = vld [vmem:[#allocation8 + $0xe8] sm:$0xff]
    %v233 = vld [vmem:[#allocation8 + $0xf0] sm:$0xff]
    %v234 = vld [vmem:[#allocation8 + $0xf8] sm:$0xff]
    %v235 = vld [vmem:[#allocation8 + $0x100] sm:$0xff]
    %v236 = vld [vmem:[#allocation8 + $0x108] sm:$0xff]
    %v237 = vld [vmem:[#allocation8 + $0x110] sm:$0xff]
    %v238 = vld [vmem:[#allocation8 + $0x118] sm:$0xff]
    %v239 = vld [vmem:[#allocation8 + $0x120] sm:$0xff]
    %v240 = vld [vmem:[#allocation8 + $0x128] sm:$0xff]
    %v241 = vld [vmem:[#allocation8 + $0x130] sm:$0xff]
    %v242 = vld [vmem:[#allocation8 + $0x138] sm:$0xff]
    %v243 = vld [vmem:[#allocation8 + $0x140] sm:$0xff]
    %v244 = vld [vmem:[#allocation8 + $0x148] sm:$0xff]
    %v245 = vld [vmem:[#allocation8 + $0x150] sm:$0xff]
    %v246 = vld [vmem:[#allocation8 + $0x158] sm:$0xff]
    %v247 = vld [vmem:[#allocation8 + $0x160] sm:$0xff]
    %v248 = vld [vmem:[#allocation8 + $0x168] sm:$0xff]
    %v249 = vld [vmem:[#allocation8 + $0x170] sm:$0xff]
    %v250 = vld [vmem:[#allocation8 + $0x178] sm:$0xff]
    %251 = vmatpush.msra.mxu0 %v248
    %252 = vmatpush.msra.mxu0 %v245
    %253 = vmatpush.msra.mxu0 %v242
    %254 = vmatpush.msra.mxu0 %v239
    %255 = vmatpush.msra.mxu0 %v236
    %256 = vmatpush.msra.mxu0 %v233
    %257 = vmatpush.msra.mxu0 %v230
    %258 = vmatpush.msra.mxu0 %v227
    %259 = vmatpush.msra.mxu0 %v224
    %260 = vmatpush.msra.mxu0 %v221
    %261 = vmatpush.msra.mxu0 %v218
    %262 = vmatpush.msra.mxu0 %v215
    %263 = vmatpush.msra.mxu0 %v212
    %264 = vmatpush.msra.mxu0 %v209
    %265 = vmatpush.msra.mxu0 %v206
    %266 = vmatpush.msra.mxu0 %v203
    %267 = vmatmul.f32.gmra.mxu0 %v94
    %v268 = vpop.f32.mrf.mxu0
    %v269 = vadd.f32 0.0, %v268
    %270 = vdwg.mxu0
    %271 = vmatpush.msra.mxu0 %v249
    %272 = vmatpush.msra.mxu0 %v246
    %273 = vmatpush.msra.mxu0 %v243
    %274 = vmatpush.msra.mxu0 %v240
    %275 = vmatpush.msra.mxu0 %v237
    %276 = vmatpush.msra.mxu0 %v234
    %277 = vmatpush.msra.mxu0 %v231
    %278 = vmatpush.msra.mxu0 %v228
    %279 = vmatpush.msra.mxu0 %v225
    %280 = vmatpush.msra.mxu0 %v222
    %281 = vmatpush.msra.mxu0 %v219
    %282 = vmatpush.msra.mxu0 %v216
    %283 = vmatpush.msra.mxu0 %v213
    %284 = vmatpush.msra.mxu0 %v210
    %285 = vmatpush.msra.mxu0 %v207
    %286 = vmatpush.msra.mxu0 %v204
    %287 = vmatmul.f32.gmra.mxu0 %v94
    %v288 = vpop.f32.mrf.mxu0
    %v289 = vadd.f32 0.0, %v288
    %290 = vdwg.mxu0
    %291 = vmatpush.msra.mxu0 %v250
    %292 = vmatpush.msra.mxu0 %v247
    %293 = vmatpush.msra.mxu0 %v244
    %294 = vmatpush.msra.mxu0 %v241
    %295 = vmatpush.msra.mxu0 %v238
    %296 = vmatpush.msra.mxu0 %v235
    %297 = vmatpush.msra.mxu0 %v232
    %298 = vmatpush.msra.mxu0 %v229
    %299 = vmatpush.msra.mxu0 %v226
    %300 = vmatpush.msra.mxu0 %v223
    %301 = vmatpush.msra.mxu0 %v220
    %302 = vmatpush.msra.mxu0 %v217
    %303 = vmatpush.msra.mxu0 %v214
    %304 = vmatpush.msra.mxu0 %v211
    %305 = vmatpush.msra.mxu0 %v208
    %306 = vmatpush.msra.mxu0 %v205
    %307 = vmatmul.f32.gmra.mxu0 %v94
    %v308 = vpop.f32.mrf.mxu0
    %v309 = vadd.f32 0.0, %v308
    %310 = vdwg.mxu0
    %v311 = vld [vmem:[#allocation10] sm:$0xf]
    %v312 = vadd.f32 %v161, %v269
    %v313 = vperm.slane %v311, 0
    %v314 = vadd.f32 %v312, %v313
    %v315 = vxor.u32 %v314, 2147483648
    %v316 = vmul.f32 %v315, 1.442695
    %v317 = vpow.pop %v316
    %v318 = vadd.f32 %v317, 1.0
    %v319 = vrcp.pop %v318
    %v320 = vmul.f32 %v318, %v319
    %v321 = vsub.f32 1.0, %v320
    %v322 = vmul.f32 %v319, %v321
    %v323 = vadd.f32 %v319, %v322
    %vm324 = vweird.f32 %v318
    %vm325 = vweird.f32 %v319
    %vm326 = vmor %vm324, %vm325
    %v327 = vsel %vm326, %v319, %v323
    %v328 = vand.u32 2147483647, %v318
    %vm329 = vcmp.eq.f32.partialorder %v328, 8.507059e+37
    %v330 = vand.u32 %v318, 2147483648
    %v331 = vor.u32 1.1754944e-38, %v330
    %v332 = vsel %vm329, %v331, %v327
    %v333 = vmul.f32 1.0, %v332
    %v334 = vadd.f32 %v181, %v289
    %v335 = vperm.slane %v311, 1
    %v336 = vadd.f32 %v334, %v335
    %v337 = vxor.u32 %v336, 2147483648
    %v338 = vmul.f32 %v337, 1.442695
    %v339 = vpow.pop %v338
    %v340 = vadd.f32 %v339, 1.0
    %v341 = vrcp.pop %v340
    %v342 = vmul.f32 %v340, %v341
    %v343 = vsub.f32 1.0, %v342
    %v344 = vmul.f32 %v341, %v343
    %v345 = vadd.f32 %v341, %v344
    %vm346 = vweird.f32 %v340
    %vm347 = vweird.f32 %v341
    %vm348 = vmor %vm346, %vm347
    %v349 = vsel %vm348, %v341, %v345
    %v350 = vand.u32 2147483647, %v340
    %vm351 = vcmp.eq.f32.partialorder %v350, 8.507059e+37
    %v352 = vand.u32 %v340, 2147483648
    %v353 = vor.u32 1.1754944e-38, %v352
    %v354 = vsel %vm351, %v353, %v349
    %v355 = vmul.f32 1.0, %v354
    %v356 = vperm.slane %v311, 2
    %v357 = vadd.f32 %v201, %v356
    %v358 = vperm.slane %v311, 3
    %v359 = vadd.f32 %v309, %v358
    %v360 = vmul.f32 %v333, %v359
    %v361 = vadd.f32 %v357, %v360
    %v362 = vtanh.pop %v361
    %s363 = smul.u32 0, 128
    %s364 = sshra.s32 %s363, 7
    %s365 = sand.u32 %s363, 127
    %s366 = scalar_lea.vmem [#allocation5], %s364
    %v367 = vld [vmem:[%s366] sm:$0xff]
    %v368 = vsub.f32 %v367, %v362
    %v369 = vmul.f32 %v355, %v368
    %v370 = vadd.f32 %v362, %v369
    %371 = vst [vmem:[#allocation11] sm:$0xff] %v370
    // Predicated region
    $region42: #{tpu_custom_call.1} parent=1 // pred_check
      _
    $region43: #{tpu_custom_call.1} parent=1 // pred_check_branch
      %373 = sbr.rel (0) target = $region45
    $region44: #{tpu_custom_call.1} parent=1 // pred_region
      %375 = vsyncadd [#allocation4], 0
      %s377 = sshll.u32 [#allocation11], 4
      %s378 = int_to_ptr.vmem [resolvable:$true] %s377
      %s379 = sshll.u32 %s5, 4
      %s380 = int_to_ptr.hbm [resolvable:$true] %s379
      %382 = dma.vmem_to_hbm [thread:$0]  %s378, 128, %s380, [#allocation4]
    $region45: #{tpu_custom_call.1} parent=1 // pred_fallthru
      _
    // Predicated region
    $region46: #{tpu_custom_call.1} parent=1 // pred_check
      _
    $region47: #{tpu_custom_call.1} parent=1 // pred_check_branch
      %384 = sbr.rel (0) target = $region49
    $region48: #{tpu_custom_call.1} parent=1 // pred_region
      %386 = dma.done [#allocation4], 128
    $region49: #{tpu_custom_call.1} parent=1 // pred_fallthru
      _
    %387 = vsyncpa [#allocation3], 1
    %388 = vsyncpa [#allocation6], 1
    %389 = vsyncpa [#allocation9], 1
    %390 = vsyncpa [#allocation4], 1

</llo_original>
